<compile_context>
chip_gen: v7x
topology: tpu7x:2x2x1
jax: 0.10.0
libtpu: 0.0.40
codegen_flags: <defaults>
</compile_context>

<pallas_src>
import functools

import jax
import jax.numpy as jnp
from jax.experimental import pallas as pl
from jax.experimental.pallas import tpu as pltpu


def _mf_kernel(uf_ref, if_ref, ub_ref, ib_ref, out_ref):
    # uf_ref, if_ref : (F, TB)  batch-minor gathered user / item factor tiles
    # ub_ref, ib_ref : (1, TB)  lane-dense gathered user / item biases
    # out_ref        : (1, TB)  lane-dense output
    uf = uf_ref[...].astype(jnp.float32)                 # VPU (explicit upcast: v5e)
    itf = if_ref[...].astype(jnp.float32)
    prod = uf * itf                                      # VPU elementwise, dense lanes
    dot = jnp.sum(prod, axis=0, keepdims=True)           # XLU sublane reduce -> (1, TB)
    res = (ub_ref[...].astype(jnp.float32)
           + ib_ref[...].astype(jnp.float32)
           + dot)                                        # stays lane-dense, no relayout
    out_ref[...] = res.astype(out_ref.dtype)             # full-width (unmasked) vst


@functools.partial(jax.jit, static_argnames=("tb", "stream_dtype"))
def mf_forward(user, item, user_factors, item_factors, user_biases,
               item_biases, *, tb=2048, stream_dtype=None):
    """Matrix-factorization score for (user, item) index pairs -> (B,) f32.

    tb            : batch tile (lane axis), multiple of 128.  Sweep 2048-4096;
                    use >=4096 on v7x, ~2048 is enough on v5e.
    stream_dtype  : optional dtype for the gathered factor streams (e.g.
                    jnp.bfloat16) to halve the dominant HBM traffic; the
                    kernel up-casts to f32 before the reduction.
    """
    B = user.shape[0]
    F = user_factors.shape[1]
    assert tb % 128 == 0, "batch tile is the lane axis: must be a multiple of 128"

    # Pad the batch to a tile multiple so arbitrary B works (padded rows use
    # index 0, a valid row; their results are sliced away below).
    nb = max(1, pl.cdiv(B, tb))
    Bp = nb * tb
    pad = Bp - B
    user_p = jnp.pad(user, (0, pad))
    item_p = jnp.pad(item, (0, pad))

    # --- glue: embedding-row gathers, batch-minor layout (see module doc) ---
    uf = jnp.take(user_factors, user_p, axis=0)               # (Bp, F)
    itf = jnp.take(item_factors, item_p, axis=0)               # (Bp, F)
    if stream_dtype is not None:
        uf = uf.astype(stream_dtype)
        itf = itf.astype(stream_dtype)
    uf = uf.T                                                  # (F, Bp) lane-dense batch
    itf = itf.T                                                # (F, Bp)
    # Lane-dense bias layout: (Bp,) -> (1, Bp)
    ub = user_biases[user_p, 0].reshape(1, Bp)
    ib = item_biases[item_p, 0].reshape(1, Bp)

    bytes_accessed = (2 * Bp * F * uf.dtype.itemsize           # factor streams
                      + 2 * Bp * ub.dtype.itemsize             # biases
                      + Bp * 4)                                # f32 output
    cost = pl.CostEstimate(flops=2 * Bp * F, transcendentals=0,
                           bytes_accessed=bytes_accessed)

    out = pl.pallas_call(
        _mf_kernel,
        out_shape=jax.ShapeDtypeStruct((1, Bp), jnp.float32),
        grid_spec=pltpu.PrefetchScalarGridSpec(
            num_scalar_prefetch=0,
            grid=(nb,),
            in_specs=[
                pl.BlockSpec((F, tb), lambda i: (0, i)),
                pl.BlockSpec((F, tb), lambda i: (0, i)),
                pl.BlockSpec((1, tb), lambda i: (0, i)),
                pl.BlockSpec((1, tb), lambda i: (0, i)),
            ],
            out_specs=pl.BlockSpec((1, tb), lambda i: (0, i)),
        ),
        compiler_params=pltpu.CompilerParams(
            dimension_semantics=("parallel",)),   # v7x: shard tiles over both TCs
        cost_estimate=cost,
    )(uf, itf, ub, ib)

    return out.reshape(Bp)[:B]                    # squeeze(dim=1) + drop padding


def init_params(key, num_users, num_items, n_factors=50):
    """Deterministic init matching the torch module's __init__."""
    ku, ki = jax.random.split(key)

    def xavier_uniform(k, shape):
        fan_in, fan_out = shape[0], shape[1]
        bound = (6.0 / (fan_in + fan_out)) ** 0.5
        return jax.random.uniform(k, shape, jnp.float32, -bound, bound)

    user_factors = xavier_uniform(ku, (num_users, n_factors))
    item_factors = xavier_uniform(ki, (num_items, n_factors))
    user_biases = jnp.zeros((num_users, 1), jnp.float32)
    item_biases = jnp.zeros((num_items, 1), jnp.float32)
    return user_factors, item_factors, user_biases, item_biases


def reference_forward(user, item, user_factors, item_factors, user_biases,
                      item_biases, stream_dtype=None):
    uf = user_factors[user]
    itf = item_factors[item]
    if stream_dtype is not None:                   # mirror the kernel's stream rounding
        uf = uf.astype(stream_dtype).astype(jnp.float32)
        itf = itf.astype(stream_dtype).astype(jnp.float32)
    pred = user_biases[user] + item_biases[item]
    pred = pred + jnp.sum(uf * itf, axis=1, keepdims=True)
    return pred[:, 0]


if __name__ == "__main__":
    num_users, num_items, n_factors = 32, 48, 50
    batch = 300          # deliberately NOT a tile multiple -> exercises padding
    tb = 256             # small tile for the demo (production default is 2048+)

    key = jax.random.PRNGKey(0)
    kp, ku, ki = jax.random.split(key, 3)

    params = init_params(kp, num_users, num_items, n_factors)
    user = jax.random.randint(ku, (batch,), 0, num_users, dtype=jnp.int32)
    item = jax.random.randint(ki, (batch,), 0, num_items, dtype=jnp.int32)

    # f32 factor streams: exact check vs. the f32 reference.
    out = mf_forward(user, item, *params, tb=tb)
    out = jax.block_until_ready(out)
    ref = reference_forward(user, item, *params)
    assert out.shape == (batch,)
    assert jnp.allclose(out, ref, atol=1e-5, rtol=1e-5)

    # bf16 factor streams (halves dominant HBM traffic): check vs. a reference
    # that applies the same stream rounding, so the comparison stays tight.
    out_bf16 = mf_forward(user, item, *params, tb=tb, stream_dtype=jnp.bfloat16)
    out_bf16 = jax.block_until_ready(out_bf16)
    ref_bf16 = reference_forward(user, item, *params, stream_dtype=jnp.bfloat16)
    assert out_bf16.shape == (batch,)
    assert jnp.allclose(out_bf16, ref_bf16, atol=1e-4, rtol=1e-4)

    print("KERNEL_OK")
</pallas_src>

<mosaic_0001>
module attributes {stable_mosaic.version = 11 : i64} {
  func.func @_mf_kernel(%arg0: i32, %arg1: memref<50x256xf32, #tpu.memory_space<vmem>>, %arg2: memref<50x256xf32, #tpu.memory_space<vmem>>, %arg3: memref<1x256xf32, #tpu.memory_space<vmem>>, %arg4: memref<1x256xf32, #tpu.memory_space<vmem>>, %arg5: memref<1x256xf32, #tpu.memory_space<vmem>>) attributes {dimension_semantics = [#tpu.dimension_semantics<parallel>], iteration_bounds = array<i64: 2>, scalar_prefetch = 0 : i64, scratch_operands = 0 : i64, tpu.core_type = #tpu.core_type<tc>, window_params = [{transform_indices = @transform_0, window_bounds = array<i64: 50, 256>}, {transform_indices = @transform_1, window_bounds = array<i64: 50, 256>}, {transform_indices = @transform_2, window_bounds = array<i64: 1, 256>}, {transform_indices = @transform_3, window_bounds = array<i64: 1, 256>}, {transform_indices = @transform_4, window_bounds = array<i64: 1, 256>}]} {
    %c0 = arith.constant 0 : index
    %c0_0 = arith.constant 0 : index
    %0 = vector.load %arg1[%c0, %c0_0] : memref<50x256xf32, #tpu.memory_space<vmem>>, vector<50x256xf32>
    %c0_1 = arith.constant 0 : index
    %c0_2 = arith.constant 0 : index
    %1 = vector.load %arg2[%c0_1, %c0_2] : memref<50x256xf32, #tpu.memory_space<vmem>>, vector<50x256xf32>
    %2 = arith.mulf %0, %1 : vector<50x256xf32>
    %cst = arith.constant dense<0.000000e+00> : vector<256xf32>
    %3 = vector.multi_reduction <add>, %2, %cst [0] : vector<50x256xf32> to vector<256xf32>
    %4 = vector.shape_cast %3 : vector<256xf32> to vector<1x256xf32>
    %c0_3 = arith.constant 0 : index
    %c0_4 = arith.constant 0 : index
    %5 = vector.load %arg3[%c0_3, %c0_4] : memref<1x256xf32, #tpu.memory_space<vmem>>, vector<1x256xf32>
    %c0_5 = arith.constant 0 : index
    %c0_6 = arith.constant 0 : index
    %6 = vector.load %arg4[%c0_5, %c0_6] : memref<1x256xf32, #tpu.memory_space<vmem>>, vector<1x256xf32>
    %7 = arith.addf %5, %6 : vector<1x256xf32>
    %8 = arith.addf %7, %4 : vector<1x256xf32>
    %c0_7 = arith.constant 0 : index
    %c0_8 = arith.constant 0 : index
    %9 = vector.load %arg5[%c0_7, %c0_8] : memref<1x256xf32, #tpu.memory_space<vmem>>, vector<1x256xf32>
    tpu.vector_store %arg5[%c0_7, %c0_8], %8 {strides = array<i32>} : memref<1x256xf32, #tpu.memory_space<vmem>>, vector<1x256xf32>,
    return
  }
  func.func @transform_0(%arg0: i32) -> (i32, i32) {
    %c0_i32 = arith.constant 0 : i32
    %c0_i32_0 = arith.constant 0 : i32
    return %c0_i32, %arg0 : i32, i32
  }
  func.func @transform_1(%arg0: i32) -> (i32, i32) {
    %c0_i32 = arith.constant 0 : i32
    %c0_i32_0 = arith.constant 0 : i32
    return %c0_i32, %arg0 : i32, i32
  }
  func.func @transform_2(%arg0: i32) -> (i32, i32) {
    %c0_i32 = arith.constant 0 : i32
    %c0_i32_0 = arith.constant 0 : i32
    return %c0_i32, %arg0 : i32, i32
  }
  func.func @transform_3(%arg0: i32) -> (i32, i32) {
    %c0_i32 = arith.constant 0 : i32
    %c0_i32_0 = arith.constant 0 : i32
    return %c0_i32, %arg0 : i32, i32
  }
  func.func @transform_4(%arg0: i32) -> (i32, i32) {
    %c0_i32 = arith.constant 0 : i32
    %c0_i32_0 = arith.constant 0 : i32
    return %c0_i32, %arg0 : i32, i32
  }
}

</mosaic_0001>

<llo_original>
// kernel: mf_forward.1
$region0: #{mf_forward.1}
  #allocation0 [shape = 'u32[]', space=smem, size = 0x4, offset = 0x4, fixed_abs, tag = 'smem constant byte address 0x4 - core index']
  #allocation1 [shape = 'u32[144,128]{1,0:T(1,128)}', space=vmem, size = 0x12000, scoped, tag = 'internal scratch']
  %s0 = inlined_call_operand.vmem [shape: f32[50,512], index: 0, kind: input, shape index: {}]
  %s1 = inlined_call_operand.vmem [shape: f32[50,512], index: 1, kind: input, shape index: {}]
  %s2 = inlined_call_operand.vmem [shape: f32[1,512], index: 2, kind: input, shape index: {}]
  %s3 = inlined_call_operand.vmem [shape: f32[1,512], index: 3, kind: input, shape index: {}]
  %s4 = inlined_call_operand.vmem [shape: f32[1,512], index: 4, kind: output, shape index: {}]
  %s5 = sld [smem:[#allocation0]]
  $region95: #{mf_forward.1} parent=0
    _
  %s7 = ssub.s32 1, %s5
  %s8 = scalar_select 0, %s7, %s5
  $region1: #{mf_forward.1} parent=0
    #allocation2 [shape = 'u8[114688]{0}', space=vmem, size = 0x1c000, scoped, tag = 'input window, operand 0']
    #allocation3 [shape = 'u8[114688]{0}', space=vmem, size = 0x1c000, scoped, tag = 'input window, operand 1']
    loop: start=0, step=1, limit=4
    $region2: #{mf_forward.1} parent=1 // loop_pre_header
      _
    $region3: #{mf_forward.1} parent=1 // loop_header
      %s10 = sphi 0, %s14
      %p11 = scmp.ge.s32.totalorder %s10, 4
      %s20 = sphi 0, %s22
      %s23 = sphi 0, %s20
      %s24 = sphi 0, %s23
      %s40 = sphi 0, %s24
      %s46 = sphi 0, %s48
      %s49 = sphi 0, %s46
      %s50 = sphi 0, %s49
      %s66 = sphi 0, %s50
      %s72 = sphi 0, %s74
      %s75 = sphi 0, %s72
      %s76 = sphi 0, %s75
      %s92 = sphi 0, %s76
      %s98 = sphi 0, %s100
      %s101 = sphi 0, %s98
      %s102 = sphi 0, %s101
      %s118 = sphi 0, %s102
      %s124 = sphi 0, %s126
      %s127 = sphi 0, %s124
      %s128 = sphi 0, %s127
      %s144 = sphi 0, %s128
    $region4: #{mf_forward.1} parent=1 // loop_header_branch
      %13 = sbr.rel (%p11) target = $region8
    $region5: #{mf_forward.1} parent=1 // loop_body
      %s15 = ssub.s32 %s10, 1
      %s16 = ssub.s32 %s10, 2
      %s17 = sadd.s32 %s10, 1
      %s18 = ssub.s32 %s10, %s17
      %p19 = scmp.eq.s32.totalorder %s18, 0
      %s21 = sadd.s32 %s20, 1
      %s22 = scalar_select %p19, %s20, %s21
      %p25 = pneg %p19
      %p26 = scmp.eq.s32.totalorder %s10, 1
      %p27 = por %p25, %p26
      %p28 = scmp.ne.s32.totalorder %s20, %s23
      %p29 = scmp.eq.s32.totalorder %s10, 0
      %p30 = por %p28, %p29
      %p31 = scmp.ne.s32.totalorder %s20, %s23
      %p32 = scmp.eq.s32.totalorder %s15, 1
      %p33 = por %p31, %p32
      %p34 = scmp.ne.s32.totalorder %s23, %s24
      %p35 = scmp.eq.s32.totalorder %s15, 0
      %p36 = por %p34, %p35
      %p37 = scmp.ne.s32.totalorder %s23, %s24
      %p38 = scmp.eq.s32.totalorder %s16, 1
      %p39 = por %p37, %p38
      %p41 = scmp.ne.s32.totalorder %s24, %s40
      %p42 = scmp.eq.s32.totalorder %s16, 0
      %p43 = por %p41, %p42
      %s44 = ssub.s32 %s10, %s17
      %p45 = scmp.eq.s32.totalorder %s44, 0
      %s47 = sadd.s32 %s46, 1
      %s48 = scalar_select %p45, %s46, %s47
      %p51 = pneg %p45
      %p52 = scmp.eq.s32.totalorder %s10, 1
      %p53 = por %p51, %p52
      %p54 = scmp.ne.s32.totalorder %s46, %s49
      %p55 = scmp.eq.s32.totalorder %s10, 0
      %p56 = por %p54, %p55
      %p57 = scmp.ne.s32.totalorder %s46, %s49
      %p58 = scmp.eq.s32.totalorder %s15, 1
      %p59 = por %p57, %p58
      %p60 = scmp.ne.s32.totalorder %s49, %s50
      %p61 = scmp.eq.s32.totalorder %s15, 0
      %p62 = por %p60, %p61
      %p63 = scmp.ne.s32.totalorder %s49, %s50
      %p64 = scmp.eq.s32.totalorder %s16, 1
      %p65 = por %p63, %p64
      %p67 = scmp.ne.s32.totalorder %s50, %s66
      %p68 = scmp.eq.s32.totalorder %s16, 0
      %p69 = por %p67, %p68
      %s70 = ssub.s32 %s10, %s17
      %p71 = scmp.eq.s32.totalorder %s70, 0
      %s73 = sadd.s32 %s72, 1
      %s74 = scalar_select %p71, %s72, %s73
      %p77 = pneg %p71
      %p78 = scmp.eq.s32.totalorder %s10, 1
      %p79 = por %p77, %p78
      %p80 = scmp.ne.s32.totalorder %s72, %s75
      %p81 = scmp.eq.s32.totalorder %s10, 0
      %p82 = por %p80, %p81
      %p83 = scmp.ne.s32.totalorder %s72, %s75
      %p84 = scmp.eq.s32.totalorder %s15, 1
      %p85 = por %p83, %p84
      %p86 = scmp.ne.s32.totalorder %s75, %s76
      %p87 = scmp.eq.s32.totalorder %s15, 0
      %p88 = por %p86, %p87
      %p89 = scmp.ne.s32.totalorder %s75, %s76
      %p90 = scmp.eq.s32.totalorder %s16, 1
      %p91 = por %p89, %p90
      %p93 = scmp.ne.s32.totalorder %s76, %s92
      %p94 = scmp.eq.s32.totalorder %s16, 0
      %p95 = por %p93, %p94
      %s96 = ssub.s32 %s10, %s17
      %p97 = scmp.eq.s32.totalorder %s96, 0
      %s99 = sadd.s32 %s98, 1
      %s100 = scalar_select %p97, %s98, %s99
      %p103 = pneg %p97
      %p104 = scmp.eq.s32.totalorder %s10, 1
      %p105 = por %p103, %p104
      %p106 = scmp.ne.s32.totalorder %s98, %s101
      %p107 = scmp.eq.s32.totalorder %s10, 0
      %p108 = por %p106, %p107
      %p109 = scmp.ne.s32.totalorder %s98, %s101
      %p110 = scmp.eq.s32.totalorder %s15, 1
      %p111 = por %p109, %p110
      %p112 = scmp.ne.s32.totalorder %s101, %s102
      %p113 = scmp.eq.s32.totalorder %s15, 0
      %p114 = por %p112, %p113
      %p115 = scmp.ne.s32.totalorder %s101, %s102
      %p116 = scmp.eq.s32.totalorder %s16, 1
      %p117 = por %p115, %p116
      %p119 = scmp.ne.s32.totalorder %s102, %s118
      %p120 = scmp.eq.s32.totalorder %s16, 0
      %p121 = por %p119, %p120
      %s122 = ssub.s32 %s10, %s17
      %p123 = scmp.eq.s32.totalorder %s122, 0
      %s125 = sadd.s32 %s124, 1
      %s126 = scalar_select %p123, %s124, %s125
      %p129 = pneg %p123
      %p130 = scmp.eq.s32.totalorder %s10, 1
      %p131 = por %p129, %p130
      %p132 = scmp.ne.s32.totalorder %s124, %s127
      %p133 = scmp.eq.s32.totalorder %s10, 0
      %p134 = por %p132, %p133
      %p135 = scmp.ne.s32.totalorder %s124, %s127
      %p136 = scmp.eq.s32.totalorder %s15, 1
      %p137 = por %p135, %p136
      %p138 = scmp.ne.s32.totalorder %s127, %s128
      %p139 = scmp.eq.s32.totalorder %s15, 0
      %p140 = por %p138, %p139
      %p141 = scmp.ne.s32.totalorder %s127, %s128
      %p142 = scmp.eq.s32.totalorder %s16, 1
      %p143 = por %p141, %p142
      %p145 = scmp.ne.s32.totalorder %s128, %s144
      %p146 = scmp.eq.s32.totalorder %s16, 0
      %p147 = por %p145, %p146
      %p148 = scmp.le.s32.totalorder 1, %s10
      %p149 = scmp.lt.s32.totalorder %s10, 3
      %p150 = pnand %p148, %p149
      %p151 = pneg %p150
      // Predicated region
      $region9: #{mf_forward.1} parent=5 // pred_check
        _
      $region10: #{mf_forward.1} parent=5 // pred_check_branch
        %153 = sbr.rel (%p150) target = $region12
      $region11: #{mf_forward.1} parent=5 // pred_region
        %s154 = ssub.s32 %s10, 1
      $region12: #{mf_forward.1} parent=5 // pred_fallthru
        _
      %p155 = scmp.lt.s32.totalorder %s10, 2
      // Predicated region
      $region13: #{mf_forward.1} parent=5 // pred_check
        %p156 = pneg %p155
      $region14: #{mf_forward.1} parent=5 // pred_check_branch
        %158 = sbr.rel (%p156) target = $region16
      $region15: #{mf_forward.1} parent=5 // pred_region
        // Predicated region
        $region17: #{mf_forward.1} parent=15 // pred_check
          %p159 = pneg %p30
        $region18: #{mf_forward.1} parent=15 // pred_check_branch
          %161 = sbr.rel (%p159) target = $region20
        $region19: #{mf_forward.1} parent=15 // pred_region
          %s162 = sand.u32 %s20, 1
          %s163 = sand.u32 %s20, 1
          %s164 = smul.addr %s163, 112
          %s165 = scalar_lea.vmem [#allocation2], %s164
          %s166 = smul.u32 2, %s10
          %s167 = smul.addr %s166, 8
          %s168 = scalar_lea.vmem %s0, %s167
          // Predicated region
          $region21: #{mf_forward.1} parent=19 // pred_check
            _
          $region22: #{mf_forward.1} parent=19 // pred_check_branch
            %170 = sbr.rel (0) target = $region24
          $region23: #{mf_forward.1} parent=19 // pred_region
            // Predicated region
            $region25: #{mf_forward.1} parent=23 // pred_check
              _
            $region26: #{mf_forward.1} parent=23 // pred_check_branch
              %172 = sbr.rel (0) target = $region28
            $region27: #{mf_forward.1} parent=23 // pred_region
              loop: start=0, step=1, limit=1
              $region29: #{mf_forward.1} parent=27 // loop_pre_header
                _
              $region30: #{mf_forward.1} parent=27 // loop_header
                %s174 = sphi 0, %s178
                %p175 = scmp.ge.s32.totalorder %s174, 1
                %s179 = sphi %s168, %s168
                %s180 = sphi %s165, %s165
              $region31: #{mf_forward.1} parent=27 // loop_header_branch
                %177 = sbr.rel (%p175) target = $region35
              $region32: #{mf_forward.1} parent=27 // loop_body
                %v181 = vld [vmem:[%s179] sm:$0xff]
                %182 = vst [vmem:[%s180] sm:$0xff] %v181
                %v183 = vld [vmem:[%s179 + $0x8] sm:$0xff]
                %184 = vst [vmem:[%s180 + $0x8] sm:$0xff] %v183
                %v185 = vld [vmem:[%s179 + $0x20] sm:$0xff]
                %186 = vst [vmem:[%s180 + $0x10] sm:$0xff] %v185
                %v187 = vld [vmem:[%s179 + $0x28] sm:$0xff]
                %188 = vst [vmem:[%s180 + $0x18] sm:$0xff] %v187
                %v189 = vld [vmem:[%s179 + $0x40] sm:$0xff]
                %190 = vst [vmem:[%s180 + $0x20] sm:$0xff] %v189
                %v191 = vld [vmem:[%s179 + $0x48] sm:$0xff]
                %192 = vst [vmem:[%s180 + $0x28] sm:$0xff] %v191
                %v193 = vld [vmem:[%s179 + $0x60] sm:$0xff]
                %194 = vst [vmem:[%s180 + $0x30] sm:$0xff] %v193
                %v195 = vld [vmem:[%s179 + $0x68] sm:$0xff]
                %196 = vst [vmem:[%s180 + $0x38] sm:$0xff] %v195
                %v197 = vld [vmem:[%s179 + $0x80] sm:$0xff]
                %198 = vst [vmem:[%s180 + $0x40] sm:$0xff] %v197
                %v199 = vld [vmem:[%s179 + $0x88] sm:$0xff]
                %200 = vst [vmem:[%s180 + $0x48] sm:$0xff] %v199
                %v201 = vld [vmem:[%s179 + $0xa0] sm:$0xff]
                %202 = vst [vmem:[%s180 + $0x50] sm:$0xff] %v201
                %v203 = vld [vmem:[%s179 + $0xa8] sm:$0xff]
                %204 = vst [vmem:[%s180 + $0x58] sm:$0xff] %v203
                %v205 = vld [vmem:[%s179 + $0xc0] sm:$0xff]
                %206 = vst [vmem:[%s180 + $0x60] sm:$0xff] %v205
                %v207 = vld [vmem:[%s179 + $0xc8] sm:$0xff]
                %208 = vst [vmem:[%s180 + $0x68] sm:$0xff] %v207
              $region33: #{mf_forward.1} parent=27 // loop_footer
                %s178 = sadd.s32 1, %s174
              $region34: #{mf_forward.1} parent=27 // loop_footer_branch
                %173 = sbr.rel target = $region30
              $region35: #{mf_forward.1} parent=27 // loop_exit
                _
            $region28: #{mf_forward.1} parent=23 // pred_fallthru
              _
            // Predicated region
            $region36: #{mf_forward.1} parent=23 // pred_check
              _
            $region37: #{mf_forward.1} parent=23 // pred_check_branch
              %210 = sbr.rel target = $region39
            $region38: #{mf_forward.1} parent=23 // pred_region
              _
            $region39: #{mf_forward.1} parent=23 // pred_fallthru
              _
          $region24: #{mf_forward.1} parent=19 // pred_fallthru
            _
          %211 = vnop
        $region20: #{mf_forward.1} parent=15 // pred_fallthru
          _
        // Predicated region
        $region40: #{mf_forward.1} parent=15 // pred_check
          %p212 = pneg %p56
        $region41: #{mf_forward.1} parent=15 // pred_check_branch
          %214 = sbr.rel (%p212) target = $region43
        $region42: #{mf_forward.1} parent=15 // pred_region
          %s215 = sand.u32 %s46, 1
          %s216 = sand.u32 %s46, 1
          %s217 = smul.addr %s216, 112
          %s218 = scalar_lea.vmem [#allocation3], %s217
          %s219 = smul.u32 2, %s10
          %s220 = smul.addr %s219, 8
          %s221 = scalar_lea.vmem %s1, %s220
          // Predicated region
          $region44: #{mf_forward.1} parent=42 // pred_check
            _
          $region45: #{mf_forward.1} parent=42 // pred_check_branch
            %223 = sbr.rel (0) target = $region47
          $region46: #{mf_forward.1} parent=42 // pred_region
            // Predicated region
            $region48: #{mf_forward.1} parent=46 // pred_check
              _
            $region49: #{mf_forward.1} parent=46 // pred_check_branch
              %225 = sbr.rel (0) target = $region51
            $region50: #{mf_forward.1} parent=46 // pred_region
              loop: start=0, step=1, limit=1
              $region52: #{mf_forward.1} parent=50 // loop_pre_header
                _
              $region53: #{mf_forward.1} parent=50 // loop_header
                %s227 = sphi 0, %s231
                %p228 = scmp.ge.s32.totalorder %s227, 1
                %s232 = sphi %s221, %s221
                %s233 = sphi %s218, %s218
              $region54: #{mf_forward.1} parent=50 // loop_header_branch
                %230 = sbr.rel (%p228) target = $region58
              $region55: #{mf_forward.1} parent=50 // loop_body
                %v234 = vld [vmem:[%s232] sm:$0xff]
                %235 = vst [vmem:[%s233] sm:$0xff] %v234
                %v236 = vld [vmem:[%s232 + $0x8] sm:$0xff]
                %237 = vst [vmem:[%s233 + $0x8] sm:$0xff] %v236
                %v238 = vld [vmem:[%s232 + $0x20] sm:$0xff]
                %239 = vst [vmem:[%s233 + $0x10] sm:$0xff] %v238
                %v240 = vld [vmem:[%s232 + $0x28] sm:$0xff]
                %241 = vst [vmem:[%s233 + $0x18] sm:$0xff] %v240
                %v242 = vld [vmem:[%s232 + $0x40] sm:$0xff]
                %243 = vst [vmem:[%s233 + $0x20] sm:$0xff] %v242
                %v244 = vld [vmem:[%s232 + $0x48] sm:$0xff]
                %245 = vst [vmem:[%s233 + $0x28] sm:$0xff] %v244
                %v246 = vld [vmem:[%s232 + $0x60] sm:$0xff]
                %247 = vst [vmem:[%s233 + $0x30] sm:$0xff] %v246
                %v248 = vld [vmem:[%s232 + $0x68] sm:$0xff]
                %249 = vst [vmem:[%s233 + $0x38] sm:$0xff] %v248
                %v250 = vld [vmem:[%s232 + $0x80] sm:$0xff]
                %251 = vst [vmem:[%s233 + $0x40] sm:$0xff] %v250
                %v252 = vld [vmem:[%s232 + $0x88] sm:$0xff]
                %253 = vst [vmem:[%s233 + $0x48] sm:$0xff] %v252
                %v254 = vld [vmem:[%s232 + $0xa0] sm:$0xff]
                %255 = vst [vmem:[%s233 + $0x50] sm:$0xff] %v254
                %v256 = vld [vmem:[%s232 + $0xa8] sm:$0xff]
                %257 = vst [vmem:[%s233 + $0x58] sm:$0xff] %v256
                %v258 = vld [vmem:[%s232 + $0xc0] sm:$0xff]
                %259 = vst [vmem:[%s233 + $0x60] sm:$0xff] %v258
                %v260 = vld [vmem:[%s232 + $0xc8] sm:$0xff]
                %261 = vst [vmem:[%s233 + $0x68] sm:$0xff] %v260
              $region56: #{mf_forward.1} parent=50 // loop_footer
                %s231 = sadd.s32 1, %s227
              $region57: #{mf_forward.1} parent=50 // loop_footer_branch
                %226 = sbr.rel target = $region53
              $region58: #{mf_forward.1} parent=50 // loop_exit
                _
            $region51: #{mf_forward.1} parent=46 // pred_fallthru
              _
            // Predicated region
            $region59: #{mf_forward.1} parent=46 // pred_check
              _
            $region60: #{mf_forward.1} parent=46 // pred_check_branch
              %263 = sbr.rel target = $region62
            $region61: #{mf_forward.1} parent=46 // pred_region
              _
            $region62: #{mf_forward.1} parent=46 // pred_fallthru
              _
          $region47: #{mf_forward.1} parent=42 // pred_fallthru
            _
          %264 = vnop
        $region43: #{mf_forward.1} parent=15 // pred_fallthru
          _
        // Predicated region
        $region63: #{mf_forward.1} parent=15 // pred_check
          %p265 = pneg %p82
        $region64: #{mf_forward.1} parent=15 // pred_check_branch
          %267 = sbr.rel (%p265) target = $region66
        $region65: #{mf_forward.1} parent=15 // pred_region
          %s268 = smul.u32 2, %s10
          %p269 = scmp.lt.s32.totalorder %s268, 3
          %s270 = scalar_select %p269, %s268, 3
          %s271 = scalar_lea.vmem %s2, %s270
          %s272 = smul.u32 2, %s10
        $region66: #{mf_forward.1} parent=15 // pred_fallthru
          _
        // Predicated region
        $region67: #{mf_forward.1} parent=15 // pred_check
          %p273 = pneg %p108
        $region68: #{mf_forward.1} parent=15 // pred_check_branch
          %275 = sbr.rel (%p273) target = $region70
        $region69: #{mf_forward.1} parent=15 // pred_region
          %s276 = smul.u32 2, %s10
          %p277 = scmp.lt.s32.totalorder %s276, 3
          %s278 = scalar_select %p277, %s276, 3
          %s279 = scalar_lea.vmem %s3, %s278
          %s280 = smul.u32 2, %s10
        $region70: #{mf_forward.1} parent=15 // pred_fallthru
          _
      $region16: #{mf_forward.1} parent=5 // pred_fallthru
        _
      %p281 = scmp.le.s32.totalorder 1, %s10
      %p282 = scmp.lt.s32.totalorder %s10, 3
      %p283 = pnand %p281, %p282
      %p284 = pneg %p283
      // Predicated region
      $region71: #{mf_forward.1} parent=5 // pred_check
        _
      $region72: #{mf_forward.1} parent=5 // pred_check_branch
        %286 = sbr.rel (%p283) target = $region74
      $region73: #{mf_forward.1} parent=5 // pred_region
        %s287 = ssub.s32 %s10, 1
        %s288 = sand.u32 %s23, 1
        %s289 = sand.u32 %s23, 1
        %s290 = smul.addr %s289, 112
        %s291 = scalar_lea.vmem [#allocation2], %s290
        // Predicated region
        $region75: #{mf_forward.1} parent=73 // pred_check
          %p292 = pneg %p36
        $region76: #{mf_forward.1} parent=73 // pred_check_branch
          %294 = sbr.rel (%p292) target = $region78
        $region77: #{mf_forward.1} parent=73 // pred_region
          _
        $region78: #{mf_forward.1} parent=73 // pred_fallthru
          _
        %s295 = sand.u32 %s49, 1
        %s296 = sand.u32 %s49, 1
        %s297 = smul.addr %s296, 112
        %s298 = scalar_lea.vmem [#allocation3], %s297
        // Predicated region
        $region79: #{mf_forward.1} parent=73 // pred_check
          %p299 = pneg %p62
        $region80: #{mf_forward.1} parent=73 // pred_check_branch
          %301 = sbr.rel (%p299) target = $region82
        $region81: #{mf_forward.1} parent=73 // pred_region
          _
        $region82: #{mf_forward.1} parent=73 // pred_fallthru
          _
        %s302 = sand.u32 %s23, 1
        %s303 = sand.u32 %s23, 1
        %s304 = smul.addr %s303, 112
        %s305 = scalar_lea.vmem [#allocation2], %s304
        %p306 = pneg %p36
        %p307 = pneg %p33
        %s308 = sand.u32 %s49, 1
        %s309 = sand.u32 %s49, 1
        %s310 = smul.addr %s309, 112
        %s311 = scalar_lea.vmem [#allocation3], %s310
        %p312 = pneg %p62
        %p313 = pneg %p59
        %s314 = smul.u32 2, %s15
        %p315 = scmp.lt.s32.totalorder %s314, 3
        %s316 = scalar_select %p315, %s314, 3
        %s317 = scalar_lea.vmem %s2, %s316
        %p318 = pneg %p88
        %p319 = pneg %p85
        %s320 = smul.u32 2, %s15
        %p321 = scmp.lt.s32.totalorder %s320, 3
        %s322 = scalar_select %p321, %s320, 3
        %s323 = scalar_lea.vmem %s3, %s322
        %p324 = pneg %p114
        %p325 = pneg %p111
        %p326 = pneg %p140
        %p327 = pneg %p137
        %s328 = smul.u32 2, %s15
        %p329 = scmp.lt.s32.totalorder %s328, 3
        %s330 = scalar_select %p329, %s328, 3
        %s331 = scalar_lea.vmem %s4, %s330
        %s332 = smul.u32 2, %s15
        %s333 = smul.u32 2, %s15
        %s334 = smul.u32 2, %s15
        %p335 = scmp.lt.s32.totalorder %s334, 3
        %s336 = scalar_select %p335, %s334, 3
        %s337 = scalar_lea.vmem %s2, %s336
        %s338 = smul.u32 2, %s15
        %s339 = smul.u32 2, %s15
        %p340 = scmp.lt.s32.totalorder %s339, 3
        %s341 = scalar_select %p340, %s339, 3
        %s342 = scalar_lea.vmem %s3, %s341
        %s343 = smul.u32 2, %s15
        %s344 = smul.u32 2, %s15
        %p345 = scmp.lt.s32.totalorder %s344, 3
        %s346 = scalar_select %p345, %s344, 3
        %s347 = scalar_lea.vmem %s4, %s346
        %s348 = smul.u32 2, %s15
        %v349 = vld [vmem:[%s291] sm:$0xff]
        %v350 = vld [vmem:[%s291 + $0x8] sm:$0xff]
        %v351 = vld [vmem:[%s291 + $0x10] sm:$0xff]
        %v352 = vld [vmem:[%s291 + $0x18] sm:$0xff]
        %v353 = vld [vmem:[%s291 + $0x20] sm:$0xff]
        %v354 = vld [vmem:[%s291 + $0x28] sm:$0xff]
        %v355 = vld [vmem:[%s291 + $0x30] sm:$0xff]
        %v356 = vld [vmem:[%s291 + $0x38] sm:$0xff]
        %v357 = vld [vmem:[%s291 + $0x40] sm:$0xff]
        %v358 = vld [vmem:[%s291 + $0x48] sm:$0xff]
        %v359 = vld [vmem:[%s291 + $0x50] sm:$0xff]
        %v360 = vld [vmem:[%s291 + $0x58] sm:$0xff]
        %v361 = vld [vmem:[%s291 + $0x60] sm:$0x3]
        %v362 = vld [vmem:[%s291 + $0x68] sm:$0x3]
        %v363 = vld [vmem:[%s298] sm:$0xff]
        %v364 = vld [vmem:[%s298 + $0x8] sm:$0xff]
        %v365 = vld [vmem:[%s298 + $0x10] sm:$0xff]
        %v366 = vld [vmem:[%s298 + $0x18] sm:$0xff]
        %v367 = vld [vmem:[%s298 + $0x20] sm:$0xff]
        %v368 = vld [vmem:[%s298 + $0x28] sm:$0xff]
        %v369 = vld [vmem:[%s298 + $0x30] sm:$0xff]
        %v370 = vld [vmem:[%s298 + $0x38] sm:$0xff]
        %v371 = vld [vmem:[%s298 + $0x40] sm:$0xff]
        %v372 = vld [vmem:[%s298 + $0x48] sm:$0xff]
        %v373 = vld [vmem:[%s298 + $0x50] sm:$0xff]
        %v374 = vld [vmem:[%s298 + $0x58] sm:$0xff]
        %v375 = vld [vmem:[%s298 + $0x60] sm:$0x3]
        %v376 = vld [vmem:[%s298 + $0x68] sm:$0x3]
        %v377 = vmul.f32 %v349, %v363
        %v378 = vmul.f32 %v350, %v364
        %v379 = vmul.f32 %v351, %v365
        %v380 = vmul.f32 %v352, %v366
        %v381 = vmul.f32 %v353, %v367
        %v382 = vmul.f32 %v354, %v368
        %v383 = vmul.f32 %v355, %v369
        %v384 = vmul.f32 %v356, %v370
        %v385 = vmul.f32 %v357, %v371
        %v386 = vmul.f32 %v358, %v372
        %v387 = vmul.f32 %v359, %v373
        %v388 = vmul.f32 %v360, %v374
        %v389 = vmul.f32 %v361, %v375
        %v390 = vmul.f32 %v362, %v376
        %v391 = vadd.f32 %v377, %v379
        %v392 = vadd.f32 %v391, %v381
        %v393 = vadd.f32 %v392, %v383
        %v394 = vadd.f32 %v393, %v385
        %v395 = vadd.f32 %v394, %v387
        %vm396 = vcmask 1041408
        %v397 = vsel %vm396, %v389, 0.0
        %v398 = vadd.f32 %v395, %v397
        %v399 = vrot.slane %v398, 4
        %v400 = vadd.f32 %v398, %v399
        %v401 = vrot.slane %v400, 2
        %v402 = vadd.f32 %v400, %v401
        %v403 = vrot.slane %v402, 1
        %v404 = vadd.f32 %v402, %v403
        %v405 = vadd.f32 %v378, %v380
        %v406 = vadd.f32 %v405, %v382
        %v407 = vadd.f32 %v406, %v384
        %v408 = vadd.f32 %v407, %v386
        %v409 = vadd.f32 %v408, %v388
        %v410 = vsel %vm396, %v390, 0.0
        %v411 = vadd.f32 %v409, %v410
        %v412 = vrot.slane %v411, 4
        %v413 = vadd.f32 %v411, %v412
        %v414 = vrot.slane %v413, 2
        %v415 = vadd.f32 %v413, %v414
        %v416 = vrot.slane %v415, 1
        %v417 = vadd.f32 %v415, %v416
        %v418 = vld [vmem:[%s337] sm:$0x3]
        %v419 = vld [vmem:[%s342] sm:$0x3]
        %v420 = vadd.f32 %v418, %v419
        %v423 = vcombine.low %v404, %v417
        %v425 = vunpack.c.l.s4 1966171168
        %v426 = vunpack.c.0.s8 %v425
        %v427 = vlaneseq
        %v428 = vshrl.u32 %v427, 7
        %v429 = vsub.s32 %v426, %v428
        %v430 = vrot.slane %v423, %v429
        %v432 = vunpack.c.l.s4 1966171168
        %v433 = vunpack.c.0.s8 %v432
        %v434 = vlaneseq
        %v435 = vshrl.u32 %v434, 7
        %v436 = vsub.s32 %v433, %v435
        %v437 = vrot.slane %v430, %v436
        %v439 = vadd.f32 %v420, %v437
        %v440 = vlaneseq
        %vm441 = vcmp.ge.s32.totalorder %v440, 0
        %vm442 = vcmp.lt.s32.totalorder %v440, 256
        %vm443 = vmand %vm441, %vm442
        %444 = vst.msk [vmem:[%s347] sm:$0x3] %vm443, %v439
        %s445 = smul.u32 2, %s15
        %p446 = scmp.lt.s32.totalorder %s445, 3
        %s447 = scalar_select %p446, %s445, 3
        %s448 = scalar_lea.vmem %s4, %s447
        // Predicated region
        $region83: #{mf_forward.1} parent=73 // pred_check
          %p449 = pneg %p137
        $region84: #{mf_forward.1} parent=73 // pred_check_branch
          %451 = sbr.rel (%p449) target = $region86
        $region85: #{mf_forward.1} parent=73 // pred_region
          %s452 = smul.u32 2, %s15
        $region86: #{mf_forward.1} parent=73 // pred_fallthru
          _
      $region74: #{mf_forward.1} parent=5 // pred_fallthru
        _
      %p453 = scmp.le.s32.totalorder 2, %s10
      // Predicated region
      $region87: #{mf_forward.1} parent=5 // pred_check
        %p454 = pneg %p453
      $region88: #{mf_forward.1} parent=5 // pred_check_branch
        %456 = sbr.rel (%p454) target = $region90
      $region89: #{mf_forward.1} parent=5 // pred_region
        %s457 = ssub.s32 %s10, 2
        // Predicated region
        $region91: #{mf_forward.1} parent=89 // pred_check
          %p458 = pneg %p143
        $region92: #{mf_forward.1} parent=89 // pred_check_branch
          %460 = sbr.rel (%p458) target = $region94
        $region93: #{mf_forward.1} parent=89 // pred_region
          %s461 = smul.u32 2, %s16
          %p462 = scmp.lt.s32.totalorder %s461, 3
          %s463 = scalar_select %p462, %s461, 3
          %s464 = scalar_lea.vmem %s4, %s463
        $region94: #{mf_forward.1} parent=89 // pred_fallthru
          _
      $region90: #{mf_forward.1} parent=5 // pred_fallthru
        _
    $region6: #{mf_forward.1} parent=1 // loop_footer
      %s14 = sadd.s32 1, %s10
    $region7: #{mf_forward.1} parent=1 // loop_footer_branch
      %9 = sbr.rel target = $region3
    $region8: #{mf_forward.1} parent=1 // loop_exit
      _

</llo_original>
